<compile_context>
chip_gen: v6e
topology: v6e:2x2x1
jax: 0.10.0
libtpu: 0.0.40
codegen_flags: <defaults>
</compile_context>

<pallas_src>
import jax
import jax.numpy as jnp
from jax.experimental import pallas as pl
from jax.experimental.pallas import tpu as pltpu


def _round_up(n: int, m: int) -> int:
    return ((n + m - 1) // m) * m


def _straight_through_kernel(x_ref, v_ref, o_ref):
    # x_ref: (TB, F_pad) tile, v_ref: (1, F_pad) resident row.
    # (1, F) broadcasts over sublanes on the VPU; purely mem-bound.
    o_ref[...] = x_ref[...] * v_ref[...]


def straight_through_layer(x: jax.Array, vector: jax.Array) -> jax.Array:
    """Computes x * vector with vector of shape (1, F), x of shape (B, F)."""
    assert x.ndim == 2 and vector.ndim == 2 and vector.shape[0] == 1
    assert x.shape[1] == vector.shape[1]
    B, F = x.shape
    itemsize = jnp.dtype(x.dtype).itemsize

    # Lane-dense output: pad F to a multiple of 128.
    F_pad = _round_up(F, 128)

    # Pick the batch tile: largest multiple of 8 whose double-buffered
    # in + out working set (~4 * TB * F_pad * itemsize) stays well under a
    # conservative 32 MiB target (fits v7x's 64 MiB VMEM with headroom).
    VMEM_TARGET = 32 * 1024 * 1024
    row_bytes = F_pad * itemsize
    tb_cap = max(8, ((VMEM_TARGET // (4 * row_bytes)) // 8) * 8)
    TB = int(min(_round_up(B, 8), tb_cap, 2048))

    # Pad batch so every grid step is a full, aligned (TB, F_pad) tile.
    B_pad = _round_up(B, TB)

    x_p = x
    if (B_pad, F_pad) != (B, F):
        x_p = jnp.pad(x, ((0, B_pad - B), (0, F_pad - F)))
    v_p = vector
    if F_pad != F:
        v_p = jnp.pad(vector, ((0, 0), (0, F_pad - F)))

    grid = (B_pad // TB,)

    out = pl.pallas_call(
        _straight_through_kernel,
        out_shape=jax.ShapeDtypeStruct((B_pad, F_pad), x.dtype),
        grid=grid,
        in_specs=[
            # x: one (TB, F_pad) row-tile per grid step -> pipelined DMAs.
            pl.BlockSpec((TB, F_pad), lambda i: (i, 0)),
            # vector: same block every step -> stays resident in VMEM.
            pl.BlockSpec((1, F_pad), lambda i: (0, 0)),
        ],
        out_specs=pl.BlockSpec((TB, F_pad), lambda i: (i, 0)),
        compiler_params=pltpu.CompilerParams(
            # Independent batch tiles: allow megacore sharding (v7x 2 TCs).
            dimension_semantics=("parallel",),
            vmem_limit_bytes=48 * 1024 * 1024,
        ),
    )(x_p, v_p)

    if (B_pad, F_pad) != (B, F):
        out = out[:B, :F]
    return out


if __name__ == "__main__":
    # Small shapes consistent with the module: batch=2, input_features=32.
    batch = 2
    input_features = 32

    key = jax.random.PRNGKey(0)
    k_x, k_v = jax.random.split(key)

    # Deterministic "parameter" init (stand-in for torch.randn(1, F)).
    vector = jax.random.normal(k_v, (1, input_features), dtype=jnp.float32)
    x = jax.random.normal(k_x, (batch, input_features), dtype=jnp.float32)

    out = straight_through_layer(x, vector)
    out = jax.block_until_ready(out)

    # Correctness check against the plain-JAX reference of torch.mul broadcast.
    ref = x * vector
    assert out.shape == (batch, input_features)
    assert out.dtype == x.dtype
    assert jnp.allclose(out, ref, atol=1e-6, rtol=1e-6)

    print("KERNEL_OK")
</pallas_src>

<mosaic_0001>
module attributes {stable_mosaic.version = 11 : i64} {
  func.func @_straight_through_kernel(%arg0: i32, %arg1: memref<8x128xf32, #tpu.memory_space<vmem>>, %arg2: memref<1x128xf32, #tpu.memory_space<vmem>>, %arg3: memref<8x128xf32, #tpu.memory_space<vmem>>) attributes {dimension_semantics = [#tpu.dimension_semantics<parallel>], iteration_bounds = array<i64: 1>, scalar_prefetch = 0 : i64, scratch_operands = 0 : i64, tpu.core_type = #tpu.core_type<tc>, window_params = [{transform_indices = @transform_0, window_bounds = array<i64: 8, 128>}, {pipeline_mode = #tpu.pipeline_mode<synchronous>, transform_indices = @transform_1, window_bounds = array<i64: 1, 128>}, {transform_indices = @transform_2, window_bounds = array<i64: 8, 128>}]} {
    %c0 = arith.constant 0 : index
    %c0_0 = arith.constant 0 : index
    %0 = vector.load %arg1[%c0, %c0_0] : memref<8x128xf32, #tpu.memory_space<vmem>>, vector<8x128xf32>
    %c0_1 = arith.constant 0 : index
    %c0_2 = arith.constant 0 : index
    %1 = vector.load %arg2[%c0_1, %c0_2] : memref<1x128xf32, #tpu.memory_space<vmem>>, vector<1x128xf32>
    %2 = vector.broadcast %1 : vector<1x128xf32> to vector<8x128xf32>
    %3 = arith.mulf %0, %2 : vector<8x128xf32>
    %c0_3 = arith.constant 0 : index
    %c0_4 = arith.constant 0 : index
    %4 = vector.load %arg3[%c0_3, %c0_4] : memref<8x128xf32, #tpu.memory_space<vmem>>, vector<8x128xf32>
    tpu.vector_store %arg3[%c0_3, %c0_4], %3 {strides = array<i32>} : memref<8x128xf32, #tpu.memory_space<vmem>>, vector<8x128xf32>,
    return
  }
  func.func @transform_0(%arg0: i32) -> (i32, i32) {
    %c0_i32 = arith.constant 0 : i32
    %c0_i32_0 = arith.constant 0 : i32
    return %arg0, %c0_i32 : i32, i32
  }
  func.func @transform_1(%arg0: i32) -> (i32, i32) {
    %c0_i32 = arith.constant 0 : i32
    %c0_i32_0 = arith.constant 0 : i32
    %c0_i32_1 = arith.constant 0 : i32
    return %c0_i32, %c0_i32_0 : i32, i32
  }
  func.func @transform_2(%arg0: i32) -> (i32, i32) {
    %c0_i32 = arith.constant 0 : i32
    %c0_i32_0 = arith.constant 0 : i32
    return %arg0, %c0_i32 : i32, i32
  }
}

</mosaic_0001>

<llo_original>
// kernel: tpu_custom_call.1
$region0: #{tpu_custom_call.1}
  #allocation0 [shape = 'u32[]', space=smem, size = 0x4, offset = 0x4, fixed_abs, tag = 'smem constant byte address 0x4 - core index']
  #allocation1 [shape = 'u32[144,128]{1,0:T(1,128)}', space=vmem, size = 0x12000, scoped, tag = 'internal scratch']
  %s0 = inlined_call_operand.hbm [shape: f32[8,128], index: 0, kind: input, shape index: {}]
  %s1 = inlined_call_operand.vmem [shape: f32[1,128], index: 1, kind: input, shape index: {}]
  %s2 = inlined_call_operand.hbm [shape: f32[8,128], index: 2, kind: output, shape index: {}]
  %s3 = sld [smem:[#allocation0]]
  $region22: #{tpu_custom_call.1} parent=0
    _
  %s5 = ssub.s32 1, %s3
  %s6 = scalar_select 0, %s5, %s3
  $region1: #{tpu_custom_call.1} parent=0
    #allocation2 [shape = 'u8[4096]{0}', space=vmem, size = 0x1000, scoped, tag = 'input window, operand 0, single buffered']
    #allocation3 [shape = 's32[1]{0}', space=sflag, size = 0x4, scoped, tag = 'scoped memory for tpu_custom_call.1']
    #allocation4 [shape = 's32[1]{0}', space=sflag, size = 0x4, scoped, tag = 'scoped memory for tpu_custom_call.1']
    #allocation5 [shape = 'u8[4096]{0}', space=vmem, size = 0x1000, scoped, tag = 'output window, operand 0, single buffered']
    %7 = vsyncpa [#allocation3], 0
    %8 = vsyncpa [#allocation4], 0
    // Predicated region
    $region2: #{tpu_custom_call.1} parent=1 // pred_check
      _
    $region3: #{tpu_custom_call.1} parent=1 // pred_check_branch
      %10 = sbr.rel (0) target = $region5
    $region4: #{tpu_custom_call.1} parent=1 // pred_region
      %s12 = ssub.s32 128, 128
      %13 = vsyncadd [#allocation3], %s12
      %s15 = sshll.u32 [#allocation2], 4
      %s16 = int_to_ptr.vmem [resolvable:$true] %s15
      %18 = dma.hbm_to_vmem [thread:$0]  %s0, 128, %s16, [#allocation3]
    $region5: #{tpu_custom_call.1} parent=1 // pred_fallthru
      _
    // Predicated region
    $region6: #{tpu_custom_call.1} parent=1 // pred_check
      _
    $region7: #{tpu_custom_call.1} parent=1 // pred_check_branch
      %20 = sbr.rel (0) target = $region9
    $region8: #{tpu_custom_call.1} parent=1 // pred_region
      _
    $region9: #{tpu_custom_call.1} parent=1 // pred_fallthru
      _
    // Predicated region
    $region10: #{tpu_custom_call.1} parent=1 // pred_check
      _
    $region11: #{tpu_custom_call.1} parent=1 // pred_check_branch
      %22 = sbr.rel (0) target = $region13
    $region12: #{tpu_custom_call.1} parent=1 // pred_region
      %23 = dma.done [#allocation3], 128
    $region13: #{tpu_custom_call.1} parent=1 // pred_fallthru
      _
    %v24 = vld [vmem:[#allocation2] sm:$0xff]
    %v25 = vld [vmem:[%s1] sm:$0x1]
    %v27 = vlaneseq
    %v28 = vshrl.u32 %v27, 7
    %v29 = vsub.s32 0, %v28
    %v30 = vrot.slane %v25, %v29
    %v32 = vmul.f32 %v24, %v30
    %33 = vst [vmem:[#allocation5] sm:$0xff] %v32
    // Predicated region
    $region14: #{tpu_custom_call.1} parent=1 // pred_check
      _
    $region15: #{tpu_custom_call.1} parent=1 // pred_check_branch
      %35 = sbr.rel (0) target = $region17
    $region16: #{tpu_custom_call.1} parent=1 // pred_region
      %s37 = ssub.s32 128, 128
      %38 = vsyncadd [#allocation4], %s37
      %s40 = sshll.u32 [#allocation5], 4
      %s41 = int_to_ptr.vmem [resolvable:$true] %s40
      %43 = dma.vmem_to_hbm [thread:$0]  %s41, 128, %s2, [#allocation4]
    $region17: #{tpu_custom_call.1} parent=1 // pred_fallthru
      _
    // Predicated region
    $region18: #{tpu_custom_call.1} parent=1 // pred_check
      _
    $region19: #{tpu_custom_call.1} parent=1 // pred_check_branch
      %45 = sbr.rel (0) target = $region21
    $region20: #{tpu_custom_call.1} parent=1 // pred_region
      %46 = dma.done [#allocation4], 128
    $region21: #{tpu_custom_call.1} parent=1 // pred_fallthru
      _
    %47 = vsyncpa [#allocation3], 1
    %48 = vsyncpa [#allocation4], 1

</llo_original>
